<compile_context>
chip_gen: v5e
topology: v5e:2x2
jax: 0.10.0
libtpu: 0.0.40
codegen_flags: <defaults>
</compile_context>

<pallas_src>
import math

import jax
import jax.numpy as jnp
from jax.experimental import pallas as pl
from jax.experimental.pallas import tpu as pltpu


_MAX_BLOCK_BYTES = 8 * 1024 * 1024  # in + out blocks, double-buffered


def _make_transpose_kernel(tb):
    def kernel(x_ref, o_ref):
        # x_ref block: (TB, TL, TD) -> o_ref block: (TB, TD, TL).
        # Static unroll over the packed batch planes; each 2-D transpose goes
        # to the XLU while the surrounding DMA pipeline (the real bottleneck
        # of this mem-bound op) keeps streaming tiles.
        for b in range(tb):
            o_ref[b] = x_ref[b].T
    return kernel


def _pick_tile(n):
    # Prefer 128-multiples (legal as both sublane and lane block dims, and
    # lane-dense on the output); otherwise take the full extent.
    for t in (512, 384, 256, 128):
        if n % t == 0:
            return t
    return n


def _pick_batch_tile(batch, plane_bytes):
    # Pack as many batch planes per grid step as the VMEM budget allows
    # (amortizes the per-grid-step overhead), capped to keep the kernel's
    # static unroll small.
    cap = min(batch, 16)
    for t in range(cap, 0, -1):
        if batch % t == 0 and 4 * t * plane_bytes <= _MAX_BLOCK_BYTES:
            return t
    return 1


def _transpose_last2(x3):
    """x3: [B, L, D] -> [B, D, L] via a tiled Pallas kernel."""
    B, L, D = x3.shape
    TL = _pick_tile(L)
    TD = _pick_tile(D)
    itemsize = jnp.dtype(x3.dtype).itemsize
    plane_bytes = TL * TD * itemsize

    if 4 * plane_bytes > 24 * 1024 * 1024:
        # TODO(synk): huge planes whose dims are not 128-multiples would need
        # partial-block tiling; fall back to XLA for that rare case.
        return jnp.swapaxes(x3, 1, 2)

    TB = _pick_batch_tile(B, plane_bytes)
    grid = (B // TB, L // TL, D // TD)

    in_spec = pl.BlockSpec((TB, TL, TD), lambda b, i, j: (b, i, j))
    out_spec = pl.BlockSpec((TB, TD, TL), lambda b, i, j: (b, j, i))

    return pl.pallas_call(
        _make_transpose_kernel(TB),
        out_shape=jax.ShapeDtypeStruct((B, D, L), x3.dtype),
        grid_spec=pltpu.PrefetchScalarGridSpec(
            num_scalar_prefetch=0,
            grid=grid,
            in_specs=[in_spec],
            out_specs=out_spec,
        ),
        compiler_params=pltpu.CompilerParams(
            dimension_semantics=("parallel", "parallel", "parallel"),
            vmem_limit_bytes=32 * 1024 * 1024,
        ),
    )(x3)


def transpose_pallas(x, dim0, dim1):
    """Pallas equivalent of torch.Tensor.transpose(dim0, dim1)."""
    nd = x.ndim
    d0, d1 = sorted((dim0 % nd, dim1 % nd))
    if d0 == d1:
        return x
    if (d0, d1) != (nd - 2, nd - 1) or x.size == 0:
        # TODO(synk): PatchTST only uses Transpose(1, 2) on [B, L, D]; swaps
        # that touch a leading/batch axis (and empty arrays) fall back to XLA.
        return jnp.swapaxes(x, dim0, dim1)
    lead = x.shape[:-2]
    L, D = x.shape[-2], x.shape[-1]
    B = math.prod(lead) if lead else 1
    out3 = _transpose_last2(x.reshape(B, L, D))
    return out3.reshape(*lead, D, L)


class Transpose:
    """Mirror of the PyTorch module. `contiguous` is a no-op (output is dense)."""

    def __init__(self, *dims, contiguous=False):
        assert len(dims) == 2, "Transpose expects exactly two dims"
        self.dims = dims
        self.contiguous = contiguous

    def __call__(self, x):
        return transpose_pallas(x, *self.dims)


if __name__ == "__main__":
    key = jax.random.PRNGKey(0)
    k1, k2, k3, k4 = jax.random.split(key, 4)

    # 1) PatchTST usage: [B, L, d_model] -> [B, d_model, L]; small unaligned
    #    dims (full-extent tiles) with batch packing (TB = 2).
    x1 = jax.random.normal(k1, (2, 16, 8), dtype=jnp.float32)
    y1 = Transpose(1, 2)(x1)
    jax.block_until_ready(y1)
    assert y1.shape == (2, 8, 16)
    assert jnp.array_equal(y1, jnp.swapaxes(x1, 1, 2))

    # 2) 128-aligned dims: exercises a multi-tile grid on both tiled axes with
    #    the swapped output index map and lane-dense stores.
    x2 = jax.random.normal(k2, (2, 640, 640), dtype=jnp.float32)
    y2 = Transpose(2, 1, contiguous=True)(x2)
    jax.block_until_ready(y2)
    assert y2.shape == (2, 640, 640)
    assert jnp.array_equal(y2, jnp.swapaxes(x2, 1, 2))

    # 3) 4-D input with negative dims (leading dims flattened into the grid,
    #    TB = 8 batch packing).
    x3 = jax.random.normal(k3, (2, 4, 16, 8), dtype=jnp.float32)
    y3 = Transpose(-1, -2)(x3)
    jax.block_until_ready(y3)
    assert y3.shape == (2, 4, 8, 16)
    assert jnp.array_equal(y3, jnp.swapaxes(x3, -1, -2))

    # 4) bf16 path (packed-dtype in-tile transpose, aligned tiles).
    x4 = jax.random.normal(k4, (4, 128, 256), dtype=jnp.bfloat16)
    y4 = Transpose(1, 2)(x4)
    jax.block_until_ready(y4)
    assert y4.shape == (4, 256, 128)
    assert jnp.array_equal(y4, jnp.swapaxes(x4, 1, 2))

    # 5) Swap involving a leading axis: semantics preserved via the XLA
    #    fallback (not a Pallas path; see TODO in transpose_pallas).
    x5 = jax.random.normal(k1, (2, 3, 4), dtype=jnp.float32)
    y5 = Transpose(0, 2)(x5)
    jax.block_until_ready(y5)
    assert y5.shape == (4, 3, 2)
    assert jnp.array_equal(y5, jnp.swapaxes(x5, 0, 2))

    print("KERNEL_OK")
</pallas_src>

<mosaic_0001>
module attributes {stable_mosaic.version = 11 : i64} {
  func.func @kernel(%arg0: i32, %arg1: i32, %arg2: i32, %arg3: memref<2x16x8xf32, #tpu.memory_space<vmem>>, %arg4: memref<2x8x16xf32, #tpu.memory_space<vmem>>) attributes {dimension_semantics = [#tpu.dimension_semantics<parallel>, #tpu.dimension_semantics<parallel>, #tpu.dimension_semantics<parallel>], iteration_bounds = array<i64: 1, 1, 1>, scalar_prefetch = 0 : i64, scratch_operands = 0 : i64, tpu.core_type = #tpu.core_type<tc>, window_params = [{transform_indices = @transform_0, window_bounds = array<i64: 2, 16, 8>}, {transform_indices = @transform_1, window_bounds = array<i64: 2, 8, 16>}]} {
    %c0 = arith.constant 0 : index
    %c0_0 = arith.constant 0 : index
    %c0_1 = arith.constant 0 : index
    %0 = vector.load %arg3[%c0, %c0_0, %c0_1] : memref<2x16x8xf32, #tpu.memory_space<vmem>>, vector<1x16x8xf32>
    %1 = vector.shape_cast %0 : vector<1x16x8xf32> to vector<16x8xf32>
    %2 = tpu.transpose %1, [1, 0] : vector<16x8xf32> -> vector<8x16xf32>
    %c0_2 = arith.constant 0 : index
    %c0_3 = arith.constant 0 : index
    %c0_4 = arith.constant 0 : index
    %3 = vector.load %arg4[%c0_2, %c0_3, %c0_4] : memref<2x8x16xf32, #tpu.memory_space<vmem>>, vector<1x8x16xf32>
    %4 = vector.shape_cast %3 : vector<1x8x16xf32> to vector<8x16xf32>
    %5 = vector.shape_cast %2 : vector<8x16xf32> to vector<1x8x16xf32>
    tpu.vector_store %arg4[%c0_2, %c0_3, %c0_4], %5 {strides = array<i32>} : memref<2x8x16xf32, #tpu.memory_space<vmem>>, vector<1x8x16xf32>,
    %c1 = arith.constant 1 : index
    %c0_5 = arith.constant 0 : index
    %c0_6 = arith.constant 0 : index
    %6 = vector.load %arg3[%c1, %c0_5, %c0_6] : memref<2x16x8xf32, #tpu.memory_space<vmem>>, vector<1x16x8xf32>
    %7 = vector.shape_cast %6 : vector<1x16x8xf32> to vector<16x8xf32>
    %8 = tpu.transpose %7, [1, 0] : vector<16x8xf32> -> vector<8x16xf32>
    %c1_7 = arith.constant 1 : index
    %c0_8 = arith.constant 0 : index
    %c0_9 = arith.constant 0 : index
    %9 = vector.load %arg4[%c1_7, %c0_8, %c0_9] : memref<2x8x16xf32, #tpu.memory_space<vmem>>, vector<1x8x16xf32>
    %10 = vector.shape_cast %9 : vector<1x8x16xf32> to vector<8x16xf32>
    %11 = vector.shape_cast %8 : vector<8x16xf32> to vector<1x8x16xf32>
    tpu.vector_store %arg4[%c1_7, %c0_8, %c0_9], %11 {strides = array<i32>} : memref<2x8x16xf32, #tpu.memory_space<vmem>>, vector<1x8x16xf32>,
    return
  }
  func.func @transform_0(%arg0: i32, %arg1: i32, %arg2: i32) -> (i32, i32, i32) {
    %c0_i32 = arith.constant 0 : i32
    return %arg0, %arg1, %arg2 : i32, i32, i32
  }
  func.func @transform_1(%arg0: i32, %arg1: i32, %arg2: i32) -> (i32, i32, i32) {
    %c0_i32 = arith.constant 0 : i32
    return %arg0, %arg2, %arg1 : i32, i32, i32
  }
}

</mosaic_0001>

<llo_original>
// kernel: tpu_custom_call.1
$region0: #{tpu_custom_call.1}
  #allocation0 [shape = 'u32[]', space=smem, size = 0x4, offset = 0x4, fixed_abs, tag = 'smem constant byte address 0x4 - core index']
  #allocation1 [shape = 'u32[72,128]{1,0:T(1,128)}', space=vmem, size = 0x9000, scoped, tag = 'internal scratch']
  %s0 = inlined_call_operand.vmem [shape: f32[2,16,8], index: 0, kind: input, shape index: {}]
  %s1 = inlined_call_operand.hbm [shape: f32[2,8,16], index: 1, kind: output, shape index: {}]
  %s2 = sld [smem:[#allocation0]]
  $region14: #{tpu_custom_call.1} parent=0
    _
  %s4 = ssub.s32 1, %s2
  %s5 = scalar_select 0, %s4, %s2
  $region1: #{tpu_custom_call.1} parent=0
    #allocation2 [shape = 'u8[8192]{0}', space=vmem, size = 0x2000, scoped, tag = 'output window, operand 0, single buffered']
    #allocation3 [shape = 's32[1]{0}', space=sflag, size = 0x4, scoped, tag = 'scoped memory for tpu_custom_call.1']
    %6 = vsyncpa [#allocation3], 0
    // Predicated region
    $region2: #{tpu_custom_call.1} parent=1 // pred_check
      _
    $region3: #{tpu_custom_call.1} parent=1 // pred_check_branch
      %8 = sbr.rel (0) target = $region5
    $region4: #{tpu_custom_call.1} parent=1 // pred_region
      _
    $region5: #{tpu_custom_call.1} parent=1 // pred_fallthru
      _
    %v9 = vld [vmem:[%s0] sm:$0xff]
    %v10 = vld [vmem:[%s0 + $0x8] sm:$0xff]
    %11 = vxpose.xlu0.b32.start [1/16] %v9, 128
    %12 = vxpose.xlu0.b32.cont [2/16] %v10, 128
    %13 = vxpose.xlu0.b32.cont [3/16] 0.0, 128
    %14 = vxpose.xlu0.b32.cont [4/16] 0.0, 128
    %15 = vxpose.xlu0.b32.cont [5/16] 0.0, 128
    %16 = vxpose.xlu0.b32.cont [6/16] 0.0, 128
    %17 = vxpose.xlu0.b32.cont [7/16] 0.0, 128
    %18 = vxpose.xlu0.b32.cont [8/16] 0.0, 128
    %19 = vxpose.xlu0.b32.cont [9/16] 0.0, 128
    %20 = vxpose.xlu0.b32.cont [10/16] 0.0, 128
    %21 = vxpose.xlu0.b32.cont [11/16] 0.0, 128
    %22 = vxpose.xlu0.b32.cont [12/16] 0.0, 128
    %23 = vxpose.xlu0.b32.cont [13/16] 0.0, 128
    %24 = vxpose.xlu0.b32.cont [14/16] 0.0, 128
    %25 = vxpose.xlu0.b32.cont [15/16] 0.0, 128
    %26 = vxpose.xlu0.b32.end [16/16] 0.0, 128
    %v27 = vpop.trf.xlu0
    %v28 = vpop.trf.xlu0
    %v29 = vpop.trf.xlu0
    %v30 = vpop.trf.xlu0
    %v31 = vpop.trf.xlu0
    %v32 = vpop.trf.xlu0
    %v33 = vpop.trf.xlu0
    %v34 = vpop.trf.xlu0
    %v35 = vpop.trf.xlu0
    %v36 = vpop.trf.xlu0
    %v37 = vpop.trf.xlu0
    %v38 = vpop.trf.xlu0
    %v39 = vpop.trf.xlu0
    %v40 = vpop.trf.xlu0
    %v41 = vpop.trf.xlu0
    %v42 = vpop.trf.xlu0
    %vm43 = vcmask 130048
    %44 = vst.msk [vmem:[#allocation2] sm:$0xff] %vm43, %v27
    %s45 = scalar_lea.vmem %s0, 16
    %v46 = vld [vmem:[%s45] sm:$0xff]
    %v47 = vld [vmem:[%s45 + $0x8] sm:$0xff]
    %48 = vxpose.xlu0.b32.start [1/16] %v46, 128
    %49 = vxpose.xlu0.b32.cont [2/16] %v47, 128
    %50 = vxpose.xlu0.b32.cont [3/16] 0.0, 128
    %51 = vxpose.xlu0.b32.cont [4/16] 0.0, 128
    %52 = vxpose.xlu0.b32.cont [5/16] 0.0, 128
    %53 = vxpose.xlu0.b32.cont [6/16] 0.0, 128
    %54 = vxpose.xlu0.b32.cont [7/16] 0.0, 128
    %55 = vxpose.xlu0.b32.cont [8/16] 0.0, 128
    %56 = vxpose.xlu0.b32.cont [9/16] 0.0, 128
    %57 = vxpose.xlu0.b32.cont [10/16] 0.0, 128
    %58 = vxpose.xlu0.b32.cont [11/16] 0.0, 128
    %59 = vxpose.xlu0.b32.cont [12/16] 0.0, 128
    %60 = vxpose.xlu0.b32.cont [13/16] 0.0, 128
    %61 = vxpose.xlu0.b32.cont [14/16] 0.0, 128
    %62 = vxpose.xlu0.b32.cont [15/16] 0.0, 128
    %63 = vxpose.xlu0.b32.end [16/16] 0.0, 128
    %v64 = vpop.trf.xlu0
    %v65 = vpop.trf.xlu0
    %v66 = vpop.trf.xlu0
    %v67 = vpop.trf.xlu0
    %v68 = vpop.trf.xlu0
    %v69 = vpop.trf.xlu0
    %v70 = vpop.trf.xlu0
    %v71 = vpop.trf.xlu0
    %v72 = vpop.trf.xlu0
    %v73 = vpop.trf.xlu0
    %v74 = vpop.trf.xlu0
    %v75 = vpop.trf.xlu0
    %v76 = vpop.trf.xlu0
    %v77 = vpop.trf.xlu0
    %v78 = vpop.trf.xlu0
    %v79 = vpop.trf.xlu0
    %s80 = scalar_lea.vmem [#allocation2], 8
    %81 = vst.msk [vmem:[%s80] sm:$0xff] %vm43, %v64
    // Predicated region
    $region6: #{tpu_custom_call.1} parent=1 // pred_check
      _
    $region7: #{tpu_custom_call.1} parent=1 // pred_check_branch
      %83 = sbr.rel (0) target = $region9
    $region8: #{tpu_custom_call.1} parent=1 // pred_region
      %85 = vsyncadd [#allocation3], 0
      %s86 = sshll.u32 [#allocation2], 4
      %s87 = int_to_ptr.vmem [resolvable:$true] %s86
      %s88 = sshll.u32 %s1, 4
      %s89 = int_to_ptr.hbm [resolvable:$true] %s88
      %94 = dma.vmem_to_hbm [thread:$0]  %s87, 256, %s89, [#allocation3], 128, 128, 8
    $region9: #{tpu_custom_call.1} parent=1 // pred_fallthru
      _
    // Predicated region
    $region10: #{tpu_custom_call.1} parent=1 // pred_check
      _
    $region11: #{tpu_custom_call.1} parent=1 // pred_check_branch
      %96 = sbr.rel (0) target = $region13
    $region12: #{tpu_custom_call.1} parent=1 // pred_region
      %98 = dma.done [#allocation3], 256
    $region13: #{tpu_custom_call.1} parent=1 // pred_fallthru
      _
    %99 = vsyncpa [#allocation3], 1

</llo_original>
